<compile_context>
chip_gen: v6e
topology: v6e:2x2x1
jax: 0.10.0
libtpu: 0.0.40
codegen_flags: <defaults>
</compile_context>

<pallas_src>
import functools
import math

import jax
import jax.numpy as jnp
from jax.experimental import pallas as pl
from jax.experimental.pallas import tpu as pltpu


def _head_kernel(x_ref, w_ref, o_ref, *, head_size, mxu_dtype, approx_recip):
    # x_ref: (bb, T, C) block (already mxu_dtype if enabled);
    # w_ref: (C, 3H) fused [W_k | W_q | W_v] (already mxu_dtype if enabled);
    # o_ref: (bb, T, H) in the caller's output dtype.
    bb, T, C = x_ref.shape
    H = head_size

    # Fold batch into the GEMM M dimension (layout-trivial reshape: lanes unchanged).
    x2d = x_ref[...].reshape(bb * T, C)

    # One fused projection matmul, f32 accumulation.
    qkv = jnp.dot(x2d, w_ref[...], preferred_element_type=jnp.float32)  # (bb*T, 3H)
    k = qkv[:, 0 * H:1 * H].reshape(bb, T, H)
    q = qkv[:, 1 * H:2 * H].reshape(bb, T, H)
    v = qkv[:, 2 * H:3 * H].reshape(bb, T, H)

    # Scale the (T, H) matrix, not the (T, T) scores.
    q = q * (H ** -0.5)

    if mxu_dtype is not None:
        qm, km = q.astype(mxu_dtype), k.astype(mxu_dtype)
    else:
        qm, km = q, k
    # Contracted last dims -> MXU fed directly, no explicit k transpose.
    wei = jnp.einsum('bqd,bkd->bqk', qm, km,
                     preferred_element_type=jnp.float32)               # (bb, T, T)

    # Causal mask (lower-triangular), same as masked_fill(tril == 0, -inf).
    row = jax.lax.broadcasted_iota(jnp.int32, (T, T), 0)
    col = jax.lax.broadcasted_iota(jnp.int32, (T, T), 1)
    wei = jnp.where(col > row, -jnp.inf, wei)                          # broadcast over batch

    # Numerically-stable softmax; the diagonal is always unmasked so s > 0.
    m = jnp.max(wei, axis=-1, keepdims=True)
    if mxu_dtype is not None:
        # bf16 exp (EUP) on v6e/v7x; f32 row-sum accumulation.  Also serves as
        # the bf16 operand for the PV matmul (no separate (T, T) cast pass).
        e = jnp.exp((wei - m).astype(mxu_dtype))
        s = jnp.sum(e, axis=-1, keepdims=True, dtype=jnp.float32)
        pm, vm = e, v.astype(mxu_dtype)
    else:
        e = jnp.exp(wei - m)
        s = jnp.sum(e, axis=-1, keepdims=True)
        pm, vm = e, v

    out_un = jnp.einsum('bqk,bkd->bqd', pm, vm,
                        preferred_element_type=jnp.float32)            # (bb, T, H)
    # Normalize on the (T, H) output with an EUP reciprocal instead of dividing
    # the (T, T) matrix on the VALU.
    inv = pl.reciprocal(s, approx=approx_recip)
    o_ref[...] = (out_un * inv).astype(o_ref.dtype)


def prepare_head_params(w_key, w_query, w_value, *, mxu_dtype=jnp.bfloat16):
    """Fuse (and optionally pre-cast) the three projection weights once.

    Returns a (C, 3H) array: one DMA and one MXU matmul per forward call.
    Call this at parameter-prep time, not per forward pass.
    """
    w_qkv = jnp.concatenate([w_key, w_query, w_value], axis=1)        # (C, 3H)
    if mxu_dtype is not None:
        w_qkv = w_qkv.astype(mxu_dtype)
    return w_qkv


def _default_block_b(B):
    """B//2 on v7x (2 TensorCores per chip) so the 'parallel' batch axis is
    sharded across cores; B on v5e/v6e (single TC, no benefit from extra steps)."""
    try:
        kind = jax.devices()[0].device_kind.lower()
    except Exception:
        kind = ""
    if B % 2 == 0 and ("v7" in kind or "7x" in kind):
        return B // 2
    return B


def head_forward(x, w_qkv, *, block_b=None, approx_recip=None):
    """x: (B, T, C); w_qkv: (C, 3H) from prepare_head_params -> (B, T, H) in x.dtype.

    If w_qkv is bf16 (default prep), x is pre-cast to bf16 in the wrapper so
    the HBM->VMEM DMA moves half the bytes; all accumulation / mask / softmax
    math stays f32.  If w_qkv is f32 (prep with mxu_dtype=None, recommended on
    v5e), everything is f32 and the output matches the reference to ~1e-5.
    """
    B, T, C = x.shape
    H = w_qkv.shape[1] // 3
    out_dtype = x.dtype

    mxu_dtype = None if w_qkv.dtype == jnp.float32 else w_qkv.dtype
    x_in = x.astype(mxu_dtype) if mxu_dtype is not None else x
    if approx_recip is None:
        approx_recip = mxu_dtype is not None

    if block_b is None:
        block_b = _default_block_b(B)
    assert B % block_b == 0, "block_b must divide B"

    kernel = functools.partial(_head_kernel, head_size=H,
                               mxu_dtype=mxu_dtype, approx_recip=approx_recip)
    return pl.pallas_call(
        kernel,
        out_shape=jax.ShapeDtypeStruct((B, T, H), out_dtype),
        grid_spec=pltpu.PrefetchScalarGridSpec(
            num_scalar_prefetch=0,
            grid=(B // block_b,),
            in_specs=[
                pl.BlockSpec((block_b, T, C), lambda i: (i, 0, 0)),   # x block
                pl.BlockSpec((C, 3 * H), lambda i: (0, 0)),           # fused W_qkv (resident)
            ],
            out_specs=pl.BlockSpec((block_b, T, H), lambda i: (i, 0, 0)),
        ),
        compiler_params=pltpu.CompilerParams(
            dimension_semantics=("parallel",)),
    )(x_in, w_qkv)


def head_reference(x, w_key, w_query, w_value):
    """Pure-JAX reference matching the PyTorch forward (eval mode)."""
    H = w_key.shape[1]
    k = x @ w_key
    q = x @ w_query
    v = x @ w_value
    wei = (q @ jnp.swapaxes(k, -2, -1)) * (H ** -0.5)
    T = x.shape[1]
    tril = jnp.tril(jnp.ones((T, T)))
    wei = jnp.where(tril == 0, -jnp.inf, wei)
    wei = jax.nn.softmax(wei, axis=-1)
    return wei @ v


if __name__ == "__main__":
    # Small shapes consistent with the module: n_embd=32, block_size=8, head_size=16.
    B, T, C, H = 2, 8, 32, 16

    key = jax.random.PRNGKey(0)
    kx, kk, kq, kv = jax.random.split(key, 4)

    x = jax.random.normal(kx, (B, T, C), dtype=jnp.float32)
    # Deterministic "Linear(bias=False)"-style init: U(-1/sqrt(C), 1/sqrt(C))
    bound = 1.0 / math.sqrt(C)
    w_key = jax.random.uniform(kk, (C, H), jnp.float32, -bound, bound)
    w_query = jax.random.uniform(kq, (C, H), jnp.float32, -bound, bound)
    w_value = jax.random.uniform(kv, (C, H), jnp.float32, -bound, bound)

    ref = head_reference(x, w_key, w_query, w_value)

    # Default path: bf16 weights/inputs at the kernel boundary (half DMA bytes),
    # f32 accumulation / mask / softmax stats.
    w_qkv_bf16 = prepare_head_params(w_key, w_query, w_value)          # (C, 3H) bf16
    out_bf16 = jax.block_until_ready(head_forward(x, w_qkv_bf16))
    assert out_bf16.shape == (B, T, H)
    assert out_bf16.dtype == x.dtype
    assert jnp.allclose(out_bf16, ref, atol=3e-2, rtol=3e-2), \
        "bf16-MXU path mismatch vs reference"

    # Full-f32 path (recommended on v5e): near-exact agreement with reference math.
    w_qkv_f32 = prepare_head_params(w_key, w_query, w_value, mxu_dtype=None)
    out_f32 = jax.block_until_ready(head_forward(x, w_qkv_f32))
    assert jnp.allclose(out_f32, ref, atol=1e-5, rtol=1e-5), \
        "f32 path mismatch vs reference"

    print("KERNEL_OK")
</pallas_src>

<mosaic_0001>
module attributes {stable_mosaic.version = 11 : i64} {
  func.func @_head_kernel(%arg0: i32, %arg1: memref<2x8x32xbf16, #tpu.memory_space<vmem>>, %arg2: memref<32x48xbf16, #tpu.memory_space<vmem>>, %arg3: memref<2x8x16xf32, #tpu.memory_space<vmem>>) attributes {dimension_semantics = [#tpu.dimension_semantics<parallel>], iteration_bounds = array<i64: 1>, scalar_prefetch = 0 : i64, scratch_operands = 0 : i64, tpu.core_type = #tpu.core_type<tc>, window_params = [{transform_indices = @transform_0, window_bounds = array<i64: 2, 8, 32>}, {pipeline_mode = #tpu.pipeline_mode<synchronous>, transform_indices = @transform_1, window_bounds = array<i64: 32, 48>}, {transform_indices = @transform_2, window_bounds = array<i64: 2, 8, 16>}]} {
    %c0 = arith.constant 0 : index
    %c0_0 = arith.constant 0 : index
    %c0_1 = arith.constant 0 : index
    %0 = vector.load %arg1[%c0, %c0_0, %c0_1] : memref<2x8x32xbf16, #tpu.memory_space<vmem>>, vector<2x8x32xbf16>
    %1 = vector.shape_cast %0 : vector<2x8x32xbf16> to vector<16x32xbf16>
    %c0_2 = arith.constant 0 : index
    %c0_3 = arith.constant 0 : index
    %2 = vector.load %arg2[%c0_2, %c0_3] : memref<32x48xbf16, #tpu.memory_space<vmem>>, vector<32x48xbf16>
    %cst = arith.constant dense<0.000000e+00> : vector<16x48xf32>
    %3 = tpu.matmul %1, %2, %cst {dimension_numbers = #tpu.dot_dimension_numbers<[1], [0], [0], [1], [0, 0, 1, 1], [], []>} : vector<16x32xbf16>, vector<32x48xbf16>, vector<16x48xf32> -> vector<16x48xf32>
    %4 = vector.extract_strided_slice %3 {offsets = [0, 0], sizes = [16, 16], strides = [1, 1]} : vector<16x48xf32> to vector<16x16xf32>
    %5 = vector.shape_cast %4 : vector<16x16xf32> to vector<2x8x16xf32>
    %6 = vector.extract_strided_slice %3 {offsets = [0, 16], sizes = [16, 16], strides = [1, 1]} : vector<16x48xf32> to vector<16x16xf32>
    %7 = vector.shape_cast %6 : vector<16x16xf32> to vector<2x8x16xf32>
    %8 = vector.extract_strided_slice %3 {offsets = [0, 32], sizes = [16, 16], strides = [1, 1]} : vector<16x48xf32> to vector<16x16xf32>
    %9 = vector.shape_cast %8 : vector<16x16xf32> to vector<2x8x16xf32>
    %cst_4 = arith.constant 2.500000e-01 : f32
    %10 = vector.broadcast %cst_4 : f32 to vector<2x8x16xf32>
    %11 = arith.mulf %7, %10 : vector<2x8x16xf32>
    %12 = arith.truncf %11 : vector<2x8x16xf32> to vector<2x8x16xbf16>
    %13 = arith.truncf %5 : vector<2x8x16xf32> to vector<2x8x16xbf16>
    "tpu.trace_start"() <{level = 10 : i32, message = "bqd,bkd->bqk"}> : () -> ()
    %cst_5 = arith.constant dense<0.000000e+00> : vector<2x8x8xf32>
    %14 = tpu.matmul %12, %13, %cst_5 {dimension_numbers = #tpu.dot_dimension_numbers<[2], [2], [1], [1], [0, 0, 0, 1, 1, 1], [0], [0]>} : vector<2x8x16xbf16>, vector<2x8x16xbf16>, vector<2x8x8xf32> -> vector<2x8x8xf32>
    "tpu.trace_stop"() : () -> ()
    %15 = tpu.iota {dimensions = array<i32: 0>} : vector<8x8xi32>
    %16 = tpu.iota {dimensions = array<i32: 1>} : vector<8x8xi32>
    %17 = arith.cmpi sgt, %16, %15 : vector<8x8xi32>
    %cst_6 = arith.constant 0xFF800000 : f32
    %18 = vector.shape_cast %17 : vector<8x8xi1> to vector<1x8x8xi1>
    %19 = vector.broadcast %18 : vector<1x8x8xi1> to vector<2x8x8xi1>
    %20 = vector.broadcast %cst_6 : f32 to vector<2x8x8xf32>
    %21 = arith.select %19, %20, %14 : vector<2x8x8xi1>, vector<2x8x8xf32>
    %cst_7 = arith.constant dense<0xFF800000> : vector<2x8xf32>
    %22 = vector.multi_reduction <maximumf>, %21, %cst_7 [2] : vector<2x8x8xf32> to vector<2x8xf32>
    %23 = vector.shape_cast %22 : vector<2x8xf32> to vector<2x8x1xf32>
    %24 = vector.broadcast %23 : vector<2x8x1xf32> to vector<2x8x8xf32>
    %25 = arith.subf %21, %24 : vector<2x8x8xf32>
    %26 = arith.truncf %25 : vector<2x8x8xf32> to vector<2x8x8xbf16>
    %27 = math.exp %26 : vector<2x8x8xbf16>
    %28 = arith.extf %27 : vector<2x8x8xbf16> to vector<2x8x8xf32>
    %cst_8 = arith.constant dense<0.000000e+00> : vector<2x8xf32>
    %29 = vector.multi_reduction <add>, %28, %cst_8 [2] : vector<2x8x8xf32> to vector<2x8xf32>
    %30 = vector.shape_cast %29 : vector<2x8xf32> to vector<2x8x1xf32>
    %31 = arith.truncf %9 : vector<2x8x16xf32> to vector<2x8x16xbf16>
    "tpu.trace_start"() <{level = 10 : i32, message = "bqk,bkd->bqd"}> : () -> ()
    %cst_9 = arith.constant dense<0.000000e+00> : vector<2x8x16xf32>
    %32 = tpu.matmul %27, %31, %cst_9 {dimension_numbers = #tpu.dot_dimension_numbers<[2], [1], [1], [2], [0, 0, 0, 1, 1, 2], [0], [0]>} : vector<2x8x8xbf16>, vector<2x8x16xbf16>, vector<2x8x16xf32> -> vector<2x8x16xf32>
    "tpu.trace_stop"() : () -> ()
    %33 = tpu.reciprocal %30 {approx = true} : vector<2x8x1xf32> -> vector<2x8x1xf32>
    %34 = vector.broadcast %33 : vector<2x8x1xf32> to vector<2x8x16xf32>
    %35 = arith.mulf %32, %34 : vector<2x8x16xf32>
    %c0_10 = arith.constant 0 : index
    %c0_11 = arith.constant 0 : index
    %c0_12 = arith.constant 0 : index
    %36 = vector.load %arg3[%c0_10, %c0_11, %c0_12] : memref<2x8x16xf32, #tpu.memory_space<vmem>>, vector<2x8x16xf32>
    tpu.vector_store %arg3[%c0_10, %c0_11, %c0_12], %35 {strides = array<i32>} : memref<2x8x16xf32, #tpu.memory_space<vmem>>, vector<2x8x16xf32>,
    return
  }
  func.func @transform_0(%arg0: i32) -> (i32, i32, i32) {
    %c0_i32 = arith.constant 0 : i32
    %c0_i32_0 = arith.constant 0 : i32
    %c0_i32_1 = arith.constant 0 : i32
    return %arg0, %c0_i32, %c0_i32_0 : i32, i32, i32
  }
  func.func @transform_1(%arg0: i32) -> (i32, i32) {
    %c0_i32 = arith.constant 0 : i32
    %c0_i32_0 = arith.constant 0 : i32
    %c0_i32_1 = arith.constant 0 : i32
    return %c0_i32, %c0_i32_0 : i32, i32
  }
  func.func @transform_2(%arg0: i32) -> (i32, i32, i32) {
    %c0_i32 = arith.constant 0 : i32
    %c0_i32_0 = arith.constant 0 : i32
    %c0_i32_1 = arith.constant 0 : i32
    return %arg0, %c0_i32, %c0_i32_0 : i32, i32, i32
  }
}

</mosaic_0001>

<llo_original>
// kernel: tpu_custom_call.1
$region0: #{tpu_custom_call.1}
  #allocation0 [shape = 'u32[]', space=smem, size = 0x4, offset = 0x4, fixed_abs, tag = 'smem constant byte address 0x4 - core index']
  #allocation1 [shape = 'u32[144,128]{1,0:T(1,128)}', space=vmem, size = 0x12000, scoped, tag = 'internal scratch']
  %s0 = inlined_call_operand.hbm [shape: bf16[2,8,32], index: 0, kind: input, shape index: {}]
  %s1 = inlined_call_operand.hbm [shape: bf16[32,48], index: 1, kind: input, shape index: {}]
  %s2 = inlined_call_operand.hbm [shape: f32[2,8,16], index: 2, kind: output, shape index: {}]
  %s3 = sld [smem:[#allocation0]]
  $region26: #{tpu_custom_call.1} parent=0
    _
  %s5 = ssub.s32 1, %s3
  %s6 = scalar_select 0, %s5, %s3
  $region1: #{tpu_custom_call.1} parent=0
    #allocation2 [shape = 'u8[4096]{0}', space=vmem, size = 0x1000, scoped, tag = 'input window, operand 0, single buffered']
    #allocation3 [shape = 's32[1]{0}', space=sflag, size = 0x4, scoped, tag = 'scoped memory for tpu_custom_call.1']
    #allocation4 [shape = 's32[1]{0}', space=sflag, size = 0x4, scoped, tag = 'scoped memory for tpu_custom_call.1']
    #allocation5 [shape = 'u8[8192]{0}', space=vmem, size = 0x2000, scoped, tag = 'input window, operand 1, single buffered']
    #allocation6 [shape = 's32[1]{0}', space=sflag, size = 0x4, scoped, tag = 'scoped memory for tpu_custom_call.1']
    #allocation7 [shape = 'u8[8192]{0}', space=vmem, size = 0x2000, scoped, tag = 'output window, operand 0, single buffered']
    %7 = vsyncpa [#allocation3], 0
    %8 = vsyncpa [#allocation6], 0
    %9 = vsyncpa [#allocation4], 0
    // Predicated region
    $region2: #{tpu_custom_call.1} parent=1 // pred_check
      _
    $region3: #{tpu_custom_call.1} parent=1 // pred_check_branch
      %11 = sbr.rel (0) target = $region5
    $region4: #{tpu_custom_call.1} parent=1 // pred_region
      %s13 = ssub.s32 128, 128
      %14 = vsyncadd [#allocation3], %s13
      %s15 = sshll.u32 [#allocation2], 4
      %s16 = int_to_ptr.vmem [resolvable:$true] %s15
      %21 = dma.hbm_to_vmem [thread:$0]  %s0, 128, %s16, [#allocation3], 64, 64, 4
    $region5: #{tpu_custom_call.1} parent=1 // pred_fallthru
      _
    // Predicated region
    $region6: #{tpu_custom_call.1} parent=1 // pred_check
      _
    $region7: #{tpu_custom_call.1} parent=1 // pred_check_branch
      %23 = sbr.rel (0) target = $region9
    $region8: #{tpu_custom_call.1} parent=1 // pred_region
      %s25 = ssub.s32 256, 256
      %26 = vsyncadd [#allocation6], %s25
      %s27 = sshll.u32 [#allocation5], 4
      %s28 = int_to_ptr.vmem [resolvable:$true] %s27
      %33 = dma.hbm_to_vmem [thread:$0]  %s1, 256, %s28, [#allocation6], 64, 64, 4
    $region9: #{tpu_custom_call.1} parent=1 // pred_fallthru
      _
    // Predicated region
    $region10: #{tpu_custom_call.1} parent=1 // pred_check
      _
    $region11: #{tpu_custom_call.1} parent=1 // pred_check_branch
      %35 = sbr.rel (0) target = $region13
    $region12: #{tpu_custom_call.1} parent=1 // pred_region
      %36 = dma.done [#allocation3], 128
    $region13: #{tpu_custom_call.1} parent=1 // pred_fallthru
      _
    // Predicated region
    $region14: #{tpu_custom_call.1} parent=1 // pred_check
      _
    $region15: #{tpu_custom_call.1} parent=1 // pred_check_branch
      %38 = sbr.rel (0) target = $region17
    $region16: #{tpu_custom_call.1} parent=1 // pred_region
      %39 = dma.done [#allocation6], 256
    $region17: #{tpu_custom_call.1} parent=1 // pred_fallthru
      _
    %v41 = vld [vmem:[#allocation2] sm:$0xf]
    %v42 = vld [vmem:[#allocation2 + $0x4] sm:$0xf]
    %v43 = vld [vmem:[#allocation5] sm:$0xf]
    %v44 = vld [vmem:[#allocation5 + $0x4] sm:$0xf]
    %v45 = vld [vmem:[#allocation5 + $0x8] sm:$0xf]
    %v46 = vld [vmem:[#allocation5 + $0xc] sm:$0xf]
    %v49 = vunpack.c.l.b16 %v41
    %v50 = vunpack.c.l.b16 %v42
    %v51 = vpack.c.b16 %v50, %v49
    %v56 = vunpack.c.l.b16 %v43
    %v57 = vunpack.c.l.b16 %v44
    %v58 = vunpack.c.l.b16 %v45
    %v59 = vunpack.c.l.b16 %v46
    %v60 = vpack.c.b16 %v57, %v56
    %v61 = vpack.c.b16 %v59, %v58
    %vm64 = vcmask 261120
    %v66 = vsel %vm64, %v51, 0
    %68 = vmatprep.subr.bf16.mxu0 0
    %69 = vmatpush1.bf16.msra.mxu0 0
    %70 = vmatprep.subr.bf16.mxu0 0
    %71 = vmatpush1.bf16.msra.mxu0 0
    %72 = vmatprep.subr.bf16.mxu0 0
    %73 = vmatpush1.bf16.msra.mxu0 0
    %74 = vmatprep.subr.bf16.mxu0 0
    %75 = vmatpush1.bf16.msra.mxu0 0
    %76 = vmatprep.subr.bf16.mxu0 0
    %77 = vmatpush1.bf16.msra.mxu0 0
    %78 = vmatprep.subr.bf16.mxu0 0
    %79 = vmatpush1.bf16.msra.mxu0 0
    %80 = vmatprep.subr.bf16.mxu0 0
    %81 = vmatpush1.bf16.msra.mxu0 %v61
    %82 = vmatprep.subr.bf16.mxu0 0
    %83 = vmatpush1.bf16.msra.mxu0 %v60
    %84 = vmatprep.subr.bf16.mxu0 0
    %85 = vmatpush2.bf16.msra.mxu0 0
    %86 = vmatprep.subr.bf16.mxu0 0
    %87 = vmatpush2.bf16.msra.mxu0 0
    %88 = vmatprep.subr.bf16.mxu0 0
    %89 = vmatpush2.bf16.msra.mxu0 0
    %90 = vmatprep.subr.bf16.mxu0 0
    %91 = vmatpush2.bf16.msra.mxu0 0
    %92 = vmatprep.subr.bf16.mxu0 0
    %93 = vmatpush2.bf16.msra.mxu0 0
    %94 = vmatprep.subr.bf16.mxu0 0
    %95 = vmatpush2.bf16.msra.mxu0 0
    %96 = vmatprep.subr.bf16.mxu0 0
    %97 = vmatpush2.bf16.msra.mxu0 0
    %98 = vmatprep.subr.bf16.mxu0 0
    %99 = vmatpush2.bf16.msra.mxu0 0
    %100 = vmatprep.mubr.bf16.mxu0 0
    %101 = vmatmul.mubr.bf16.gmra.mxu0 %v66
    %v102 = vpop.f32.mrf.mxu0
    %v103 = vadd.f32 0.0, %v102
    %v104 = vpop.f32.mrf.mxu0
    %v105 = vpop.f32.mrf.mxu0
    %v106 = vadd.f32 0.0, %v105
    %v107 = vpop.f32.mrf.mxu0
    %108 = vdwg.mxu0
    %v109 = vmul.f32 %v103, 0.25
    %v110 = vmul.f32 %v106, 0.25
    %v111 = vpack.c.bf16 %v109, %v109
    %v112 = vpack.c.bf16 %v110, %v110
    %v113 = vpack.c.bf16 %v103, %v103
    %v114 = vpack.c.bf16 %v106, %v106
    %116 = vrot.lane.b32.xlu0 %v111, 112
    %v117 = vpop.permute.xlu0 %116
    %vm118 = vcmask 130048
    %v120 = vsel %vm118, %v117, 0
    %v123 = vsel %vm118, %v113, 0
    %125 = vmatprep.subr.bf16.mxu0 0
    %126 = vmatpush1.bf16.xpose.msra.mxu0 0
    %127 = vmatprep.subr.bf16.mxu0 0
    %128 = vmatpush1.bf16.xpose.msra.mxu0 0
    %129 = vmatprep.subr.bf16.mxu0 0
    %130 = vmatpush1.bf16.xpose.msra.mxu0 0
    %131 = vmatprep.subr.bf16.mxu0 0
    %132 = vmatpush1.bf16.xpose.msra.mxu0 0
    %133 = vmatprep.subr.bf16.mxu0 0
    %134 = vmatpush1.bf16.xpose.msra.mxu0 0
    %135 = vmatprep.subr.bf16.mxu0 0
    %136 = vmatpush1.bf16.xpose.msra.mxu0 0
    %137 = vmatprep.subr.bf16.mxu0 0
    %138 = vmatpush1.bf16.xpose.msra.mxu0 0
    %139 = vmatprep.subr.bf16.mxu0 0
    %140 = vmatpush1.bf16.xpose.msra.mxu0 %v123
    %141 = vmatprep.subr.bf16.mxu0 0
    %142 = vmatpush2.bf16.xpose.msra.mxu0 0
    %143 = vmatprep.subr.bf16.mxu0 0
    %144 = vmatpush2.bf16.xpose.msra.mxu0 0
    %145 = vmatprep.subr.bf16.mxu0 0
    %146 = vmatpush2.bf16.xpose.msra.mxu0 0
    %147 = vmatprep.subr.bf16.mxu0 0
    %148 = vmatpush2.bf16.xpose.msra.mxu0 0
    %149 = vmatprep.subr.bf16.mxu0 0
    %150 = vmatpush2.bf16.xpose.msra.mxu0 0
    %151 = vmatprep.subr.bf16.mxu0 0
    %152 = vmatpush2.bf16.xpose.msra.mxu0 0
    %153 = vmatprep.subr.bf16.mxu0 0
    %154 = vmatpush2.bf16.xpose.msra.mxu0 0
    %155 = vmatprep.subr.bf16.mxu0 0
    %156 = vmatpush2.bf16.xpose.msra.mxu0 0
    %157 = vmatprep.mubr.bf16.mxu0 0
    %158 = vmatmul.mubr.bf16.gmra.mxu0 %v120
    %v159 = vpop.f32.mrf.mxu0
    %v160 = vadd.f32 0.0, %v159
    %v161 = vpop.f32.mrf.mxu0
    %v162 = vpop.f32.mrf.mxu0
    %v163 = vpop.f32.mrf.mxu0
    %164 = vdwg.mxu0
    %166 = vrot.lane.b32.xlu0 %v112, 112
    %v167 = vpop.permute.xlu0 %166
    %v169 = vsel %vm118, %v167, 0
    %v172 = vsel %vm118, %v114, 0
    %174 = vmatprep.subr.bf16.mxu0 0
    %175 = vmatpush1.bf16.xpose.msra.mxu0 0
    %176 = vmatprep.subr.bf16.mxu0 0
    %177 = vmatpush1.bf16.xpose.msra.mxu0 0
    %178 = vmatprep.subr.bf16.mxu0 0
    %179 = vmatpush1.bf16.xpose.msra.mxu0 0
    %180 = vmatprep.subr.bf16.mxu0 0
    %181 = vmatpush1.bf16.xpose.msra.mxu0 0
    %182 = vmatprep.subr.bf16.mxu0 0
    %183 = vmatpush1.bf16.xpose.msra.mxu0 0
    %184 = vmatprep.subr.bf16.mxu0 0
    %185 = vmatpush1.bf16.xpose.msra.mxu0 0
    %186 = vmatprep.subr.bf16.mxu0 0
    %187 = vmatpush1.bf16.xpose.msra.mxu0 0
    %188 = vmatprep.subr.bf16.mxu0 0
    %189 = vmatpush1.bf16.xpose.msra.mxu0 %v172
    %190 = vmatprep.subr.bf16.mxu0 0
    %191 = vmatpush2.bf16.xpose.msra.mxu0 0
    %192 = vmatprep.subr.bf16.mxu0 0
    %193 = vmatpush2.bf16.xpose.msra.mxu0 0
    %194 = vmatprep.subr.bf16.mxu0 0
    %195 = vmatpush2.bf16.xpose.msra.mxu0 0
    %196 = vmatprep.subr.bf16.mxu0 0
    %197 = vmatpush2.bf16.xpose.msra.mxu0 0
    %198 = vmatprep.subr.bf16.mxu0 0
    %199 = vmatpush2.bf16.xpose.msra.mxu0 0
    %200 = vmatprep.subr.bf16.mxu0 0
    %201 = vmatpush2.bf16.xpose.msra.mxu0 0
    %202 = vmatprep.subr.bf16.mxu0 0
    %203 = vmatpush2.bf16.xpose.msra.mxu0 0
    %204 = vmatprep.subr.bf16.mxu0 0
    %205 = vmatpush2.bf16.xpose.msra.mxu0 0
    %206 = vmatprep.mubr.bf16.mxu0 0
    %207 = vmatmul.mubr.bf16.gmra.mxu0 %v169
    %v208 = vpop.f32.mrf.mxu0
    %v209 = vadd.f32 0.0, %v208
    %v210 = vpop.f32.mrf.mxu0
    %v211 = vpop.f32.mrf.mxu0
    %v212 = vpop.f32.mrf.mxu0
    %213 = vdwg.mxu0
    %v214 = vlaneseq
    %v215 = vshrl.u32 %v214, 7
    %v216 = vlaneseq
    %v217 = vand.u32 %v216, 127
    %vm218 = vcmp.gt.s32.totalorder %v217, %v215
    %v219 = vsel %vm218, 1, 0
    %vm220 = vcmp.eq.s32.totalorder %v219, 1
    %v221 = vsel %vm220, -inf, %v160
    %v222 = vsel %vm220, -inf, %v209
    %vm223 = vcmask 64512
    %v224 = vsel %vm223, %v221, -inf
    %225 = vmax.xlane.f32.xlu0 %v224
    %v226 = vpop.xlane.xlu0 %225
    %v227 = vsel %vm223, %v222, -inf
    %228 = vmax.xlane.f32.xlu0 %v227
    %v229 = vpop.xlane.xlu0 %228
    %v230 = vsub.f32 %v221, %v226
    %v231 = vsub.f32 %v222, %v229
    %v232 = vpack.c.bf16 %v230, %v230
    %v233 = vpack.c.bf16 %v231, %v231
    %v235 = vmul.bf16 %v232, 1069105081
    %v236 = vpow.bf16.pop %v235
    %v238 = vmul.bf16 %v233, 1069105081
    %v239 = vpow.bf16.pop %v238
    %v240 = vunpack.c.l.bf16 %v236
    %v241 = vunpack.c.l.bf16 %v239
    %v242 = vsel %vm223, %v240, 0.0
    %243 = vadd.xlane.f32.xlu0 %v242
    %v244 = vpop.xlane.xlu0 %243
    %v245 = vsel %vm223, %v241, 0.0
    %246 = vadd.xlane.f32.xlu0 %v245
    %v247 = vpop.xlane.xlu0 %246
    %249 = vrot.lane.b32.xlu0 %v113, 96
    %v250 = vpop.permute.xlu0 %249
    %v252 = vsel %vm223, %v236, 0
    %vm254 = vcmask 1043456
    %v256 = vsel %vm254, %v250, 0
    %258 = vmatprep.subr.bf16.mxu0 0
    %259 = vmatpush1.bf16.msra.mxu0 0
    %260 = vmatprep.subr.bf16.mxu0 0
    %261 = vmatpush1.bf16.msra.mxu0 0
    %262 = vmatprep.subr.bf16.mxu0 0
    %263 = vmatpush1.bf16.msra.mxu0 0
    %264 = vmatprep.subr.bf16.mxu0 0
    %265 = vmatpush1.bf16.msra.mxu0 0
    %266 = vmatprep.subr.bf16.mxu0 0
    %267 = vmatpush1.bf16.msra.mxu0 0
    %268 = vmatprep.subr.bf16.mxu0 0
    %269 = vmatpush1.bf16.msra.mxu0 0
    %270 = vmatprep.subr.bf16.mxu0 0
    %271 = vmatpush1.bf16.msra.mxu0 0
    %272 = vmatprep.subr.bf16.mxu0 0
    %273 = vmatpush1.bf16.msra.mxu0 %v256
    %274 = vmatprep.subr.bf16.mxu0 0
    %275 = vmatpush2.bf16.msra.mxu0 0
    %276 = vmatprep.subr.bf16.mxu0 0
    %277 = vmatpush2.bf16.msra.mxu0 0
    %278 = vmatprep.subr.bf16.mxu0 0
    %279 = vmatpush2.bf16.msra.mxu0 0
    %280 = vmatprep.subr.bf16.mxu0 0
    %281 = vmatpush2.bf16.msra.mxu0 0
    %282 = vmatprep.subr.bf16.mxu0 0
    %283 = vmatpush2.bf16.msra.mxu0 0
    %284 = vmatprep.subr.bf16.mxu0 0
    %285 = vmatpush2.bf16.msra.mxu0 0
    %286 = vmatprep.subr.bf16.mxu0 0
    %287 = vmatpush2.bf16.msra.mxu0 0
    %288 = vmatprep.subr.bf16.mxu0 0
    %289 = vmatpush2.bf16.msra.mxu0 0
    %290 = vmatprep.mubr.bf16.mxu0 0
    %291 = vmatmul.mubr.bf16.gmra.mxu0 %v252
    %v292 = vpop.f32.mrf.mxu0
    %v293 = vadd.f32 0.0, %v292
    %v294 = vpop.f32.mrf.mxu0
    %v295 = vpop.f32.mrf.mxu0
    %v296 = vpop.f32.mrf.mxu0
    %297 = vdwg.mxu0
    %299 = vrot.lane.b32.xlu0 %v114, 96
    %v300 = vpop.permute.xlu0 %299
    %v302 = vsel %vm223, %v239, 0
    %v305 = vsel %vm254, %v300, 0
    %307 = vmatprep.subr.bf16.mxu0 0
    %308 = vmatpush1.bf16.msra.mxu0 0
    %309 = vmatprep.subr.bf16.mxu0 0
    %310 = vmatpush1.bf16.msra.mxu0 0
    %311 = vmatprep.subr.bf16.mxu0 0
    %312 = vmatpush1.bf16.msra.mxu0 0
    %313 = vmatprep.subr.bf16.mxu0 0
    %314 = vmatpush1.bf16.msra.mxu0 0
    %315 = vmatprep.subr.bf16.mxu0 0
    %316 = vmatpush1.bf16.msra.mxu0 0
    %317 = vmatprep.subr.bf16.mxu0 0
    %318 = vmatpush1.bf16.msra.mxu0 0
    %319 = vmatprep.subr.bf16.mxu0 0
    %320 = vmatpush1.bf16.msra.mxu0 0
    %321 = vmatprep.subr.bf16.mxu0 0
    %322 = vmatpush1.bf16.msra.mxu0 %v305
    %323 = vmatprep.subr.bf16.mxu0 0
    %324 = vmatpush2.bf16.msra.mxu0 0
    %325 = vmatprep.subr.bf16.mxu0 0
    %326 = vmatpush2.bf16.msra.mxu0 0
    %327 = vmatprep.subr.bf16.mxu0 0
    %328 = vmatpush2.bf16.msra.mxu0 0
    %329 = vmatprep.subr.bf16.mxu0 0
    %330 = vmatpush2.bf16.msra.mxu0 0
    %331 = vmatprep.subr.bf16.mxu0 0
    %332 = vmatpush2.bf16.msra.mxu0 0
    %333 = vmatprep.subr.bf16.mxu0 0
    %334 = vmatpush2.bf16.msra.mxu0 0
    %335 = vmatprep.subr.bf16.mxu0 0
    %336 = vmatpush2.bf16.msra.mxu0 0
    %337 = vmatprep.subr.bf16.mxu0 0
    %338 = vmatpush2.bf16.msra.mxu0 0
    %339 = vmatprep.mubr.bf16.mxu0 0
    %340 = vmatmul.mubr.bf16.gmra.mxu0 %v302
    %v341 = vpop.f32.mrf.mxu0
    %v342 = vadd.f32 0.0, %v341
    %v343 = vpop.f32.mrf.mxu0
    %v344 = vpop.f32.mrf.mxu0
    %v345 = vpop.f32.mrf.mxu0
    %346 = vdwg.mxu0
    %v347 = vrcp.pop %v244
    %v348 = vrcp.pop %v247
    %v349 = vmul.f32 %v293, %v347
    %v350 = vmul.f32 %v342, %v348
    %351 = vst.msk [vmem:[#allocation7] sm:$0xff] %vm118, %v349
    %352 = vst.msk [vmem:[#allocation7 + $0x8] sm:$0xff] %vm118, %v350
    // Predicated region
    $region18: #{tpu_custom_call.1} parent=1 // pred_check
      _
    $region19: #{tpu_custom_call.1} parent=1 // pred_check_branch
      %354 = sbr.rel (0) target = $region21
    $region20: #{tpu_custom_call.1} parent=1 // pred_region
      %s356 = ssub.s32 256, 256
      %357 = vsyncadd [#allocation4], %s356
      %s358 = sshll.u32 [#allocation7], 4
      %s359 = int_to_ptr.vmem [resolvable:$true] %s358
      %364 = dma.vmem_to_hbm [thread:$0]  %s359, 256, %s2, [#allocation4], 128, 128, 8
    $region21: #{tpu_custom_call.1} parent=1 // pred_fallthru
      _
    // Predicated region
    $region22: #{tpu_custom_call.1} parent=1 // pred_check
      _
    $region23: #{tpu_custom_call.1} parent=1 // pred_check_branch
      %366 = sbr.rel (0) target = $region25
    $region24: #{tpu_custom_call.1} parent=1 // pred_region
      %367 = dma.done [#allocation4], 256
    $region25: #{tpu_custom_call.1} parent=1 // pred_fallthru
      _
    %368 = vsyncpa [#allocation3], 1
    %369 = vsyncpa [#allocation6], 1
    %370 = vsyncpa [#allocation4], 1

</llo_original>
